<compile_context>
chip_gen: v5e
topology: v5e:2x2
jax: 0.10.0
libtpu: 0.0.40
codegen_flags: <defaults>
</compile_context>

<pallas_src>
import jax
import jax.numpy as jnp
from jax import lax
from jax.experimental import pallas as pl
from jax.experimental.pallas import tpu as pltpu


def dqn_kernel(x_ref,
               w1_ref, b1_ref,
               w2_ref, b2_ref,
               w3_ref, b3_ref,
               w4_ref, b4_ref,
               o_ref):
    # Batch-on-lanes fused MLP: activations are (features, tile) throughout.
    cd = x_ref.dtype                               # MXU operand dtype (f32 or bf16)
    dn = (((1,), (1,)), ((), ()))                  # contract feature axis of both operands

    # Layer 1: W1 (64,4) contracted against the contiguous (tile,4) x block
    # (== W1 @ x.T); the rhs transpose is handled on the XLU, accumulation f32.
    h = lax.dot_general(w1_ref[...], x_ref[...], dn,
                        preferred_element_type=jnp.float32)
    h = jnp.maximum(h + b1_ref[...], 0.0).astype(cd)          # (64, tile)

    h = jnp.dot(w2_ref[...], h, preferred_element_type=jnp.float32)
    h = jnp.maximum(h + b2_ref[...], 0.0).astype(cd)          # (16, tile)

    h = jnp.dot(w3_ref[...], h, preferred_element_type=jnp.float32)
    h = jnp.maximum(h + b3_ref[...], 0.0).astype(cd)          # (8, tile)

    q = jnp.dot(w4_ref[...], h, preferred_element_type=jnp.float32) + b4_ref[...]
    o_ref[...] = q.astype(o_ref.dtype)                         # (1, tile) lane-dense


def _round_up(n, m):
    return ((n + m - 1) // m) * m


def _choose_tile(B, tm):
    gran = 256                        # MXU N granularity on v6e/v7x (v5e only needs 128)
    Bp = _round_up(B, gran)
    tile = min(tm, Bp)
    if tile == Bp and Bp >= 2 * gran:
        # Whole batch would be a single grid step: split so the "parallel" batch
        # axis gives v7x's second TensorCore work.
        tile = _round_up(pl.cdiv(Bp, 2), gran)
    return tile


def dqn_forward(x, params, *, tm=2048):
    """x: (B, 4) float32 or bfloat16. params: PyTorch (out,in) weights + (out,) biases.

    Returns (B, 1) float32 Q-values, matching DQN.forward.
    """
    B, in_dim = x.shape
    assert in_dim == 4
    assert tm % 256 == 0, "batch tile must be a multiple of 256 (MXU N granularity)"

    tile = _choose_tile(B, tm)

    # Only batches smaller than one tile get padded (cheap); larger batches rely
    # on Pallas' ragged-last-block clamping -> no extra HBM copy of x.
    x_in = x if B >= tile else jnp.pad(x, ((0, tile - B), (0, 0)))
    grid = (pl.cdiv(x_in.shape[0], tile),)
    Bout = grid[0] * tile             # lane-dense padded output width (a few KB at most)

    # MXU operand dtype follows x (bf16 streaming halves HBM reads on v6e/v7x);
    # biases stay f32 and accumulation is always f32.
    cd = x.dtype
    w1, b1 = params["w1"].astype(cd), params["b1"].astype(jnp.float32).reshape(-1, 1)
    w2, b2 = params["w2"].astype(cd), params["b2"].astype(jnp.float32).reshape(-1, 1)
    w3, b3 = params["w3"].astype(cd), params["b3"].astype(jnp.float32).reshape(-1, 1)
    w4, b4 = params["w4"].astype(cd), params["b4"].astype(jnp.float32).reshape(-1, 1)

    def const_spec(shape):
        # Constant block index -> fetched once, stays VMEM-resident across grid steps.
        return pl.BlockSpec(shape, lambda i: (0, 0))

    param_bytes = sum(int(a.size) * a.dtype.itemsize
                      for a in (w1, b1, w2, b2, w3, b3, w4, b4))
    cost = pl.CostEstimate(
        flops=2 * 1416 * B,            # 4*64 + 64*16 + 16*8 + 8*1 = 1416 MACs per row
        transcendentals=0,
        bytes_accessed=B * 4 * x.dtype.itemsize + B * 4 + param_bytes)

    out = pl.pallas_call(
        dqn_kernel,
        out_shape=jax.ShapeDtypeStruct((1, Bout), jnp.float32),
        grid_spec=pltpu.PrefetchScalarGridSpec(
            num_scalar_prefetch=0,
            grid=grid,
            in_specs=[
                pl.BlockSpec((tile, 4), lambda i: (i, 0)),     # contiguous batch-row block
                const_spec(w1.shape), const_spec(b1.shape),
                const_spec(w2.shape), const_spec(b2.shape),
                const_spec(w3.shape), const_spec(b3.shape),
                const_spec(w4.shape), const_spec(b4.shape),
            ],
            out_specs=pl.BlockSpec((1, tile), lambda i: (0, i)),  # lane-dense output slab
        ),
        compiler_params=pltpu.CompilerParams(
            dimension_semantics=("parallel",)),   # batch tiles shard across v7x's 2 TCs
        cost_estimate=cost,
    )(x_in, w1, b1, w2, b2, w3, b3, w4, b4)

    # Drop lane padding and restore the (B, 1) PyTorch output shape.
    return out[0, :B].reshape(B, 1)


def init_params(key):
    """Deterministic init matching nn.Linear default: U(-1/sqrt(fan_in), 1/sqrt(fan_in))."""
    dims = [(64, 4), (16, 64), (8, 16), (1, 8)]   # (out, in) per layer, PyTorch convention
    params = {}
    for idx, (out_d, in_d) in enumerate(dims, start=1):
        key, kw, kb = jax.random.split(key, 3)
        bound = 1.0 / jnp.sqrt(in_d)
        params[f"w{idx}"] = jax.random.uniform(
            kw, (out_d, in_d), jnp.float32, minval=-bound, maxval=bound)
        params[f"b{idx}"] = jax.random.uniform(
            kb, (out_d,), jnp.float32, minval=-bound, maxval=bound)
    return params


def dqn_reference(x, params):
    x = x.astype(jnp.float32)
    h = jnp.maximum(x @ params["w1"].T + params["b1"], 0.0)
    h = jnp.maximum(h @ params["w2"].T + params["b2"], 0.0)
    h = jnp.maximum(h @ params["w3"].T + params["b3"], 0.0)
    return h @ params["w4"].T + params["b4"]


if __name__ == "__main__":
    key = jax.random.PRNGKey(0)
    key, kx = jax.random.split(key)
    params = init_params(key)

    # TODO(synk): training path (Adam, HuberLoss, DataLoader loop) is not translated;
    # only the forward pass is implemented as a kernel.

    # 1) Small batch matching the module's DataLoader batch_size (single grid step).
    B = 64
    x = jax.random.normal(kx, (B, 4), dtype=jnp.float32)
    q = jax.block_until_ready(dqn_forward(x, params))
    q_ref = dqn_reference(x, params)
    assert q.shape == (B, 1)
    assert jnp.allclose(q, q_ref, atol=1e-5, rtol=1e-5), "f32 mismatch vs reference (B=64)"

    # 2) Multi-step grid with a ragged last block (no-pad path, 2 tiles -> megacore-friendly).
    B2 = 1000
    key, kx2 = jax.random.split(key)
    x2 = jax.random.normal(kx2, (B2, 4), dtype=jnp.float32)
    q2 = jax.block_until_ready(dqn_forward(x2, params))
    assert q2.shape == (B2, 1)
    assert jnp.allclose(q2, dqn_reference(x2, params), atol=1e-5, rtol=1e-5), \
        "f32 mismatch vs reference (B=1000)"

    # 3) bf16 input streaming (HBM-saving path on v6e/v7x); f32 accumulation, looser tolerance.
    q_bf16 = jax.block_until_ready(dqn_forward(x.astype(jnp.bfloat16), params))
    assert q_bf16.shape == (B, 1)
    assert jnp.allclose(q_bf16, q_ref, atol=5e-2, rtol=5e-2), "bf16 mismatch vs reference"

    print("KERNEL_OK")
</pallas_src>

<mosaic_0001>
module attributes {stable_mosaic.version = 11 : i64} {
  func.func @dqn_kernel(%arg0: i32, %arg1: memref<256x4xf32, #tpu.memory_space<vmem>>, %arg2: memref<64x4xf32, #tpu.memory_space<vmem>>, %arg3: memref<64x1xf32, #tpu.memory_space<vmem>>, %arg4: memref<16x64xf32, #tpu.memory_space<vmem>>, %arg5: memref<16x1xf32, #tpu.memory_space<vmem>>, %arg6: memref<8x16xf32, #tpu.memory_space<vmem>>, %arg7: memref<8x1xf32, #tpu.memory_space<vmem>>, %arg8: memref<1x8xf32, #tpu.memory_space<vmem>>, %arg9: memref<1x1xf32, #tpu.memory_space<vmem>>, %arg10: memref<1x256xf32, #tpu.memory_space<vmem>>) attributes {dimension_semantics = [#tpu.dimension_semantics<parallel>], iteration_bounds = array<i64: 1>, scalar_prefetch = 0 : i64, scratch_operands = 0 : i64, tpu.core_type = #tpu.core_type<tc>, window_params = [{transform_indices = @transform_0, window_bounds = array<i64: 256, 4>}, {pipeline_mode = #tpu.pipeline_mode<synchronous>, transform_indices = @transform_1, window_bounds = array<i64: 64, 4>}, {pipeline_mode = #tpu.pipeline_mode<synchronous>, transform_indices = @transform_2, window_bounds = array<i64: 64, 1>}, {pipeline_mode = #tpu.pipeline_mode<synchronous>, transform_indices = @transform_3, window_bounds = array<i64: 16, 64>}, {pipeline_mode = #tpu.pipeline_mode<synchronous>, transform_indices = @transform_4, window_bounds = array<i64: 16, 1>}, {pipeline_mode = #tpu.pipeline_mode<synchronous>, transform_indices = @transform_5, window_bounds = array<i64: 8, 16>}, {pipeline_mode = #tpu.pipeline_mode<synchronous>, transform_indices = @transform_6, window_bounds = array<i64: 8, 1>}, {pipeline_mode = #tpu.pipeline_mode<synchronous>, transform_indices = @transform_7, window_bounds = array<i64: 1, 8>}, {pipeline_mode = #tpu.pipeline_mode<synchronous>, transform_indices = @transform_8, window_bounds = array<i64: 1, 1>}, {transform_indices = @transform_9, window_bounds = array<i64: 1, 256>}]} {
    %c0 = arith.constant 0 : index
    %c0_0 = arith.constant 0 : index
    %0 = vector.load %arg2[%c0, %c0_0] : memref<64x4xf32, #tpu.memory_space<vmem>>, vector<64x4xf32>
    %c0_1 = arith.constant 0 : index
    %c0_2 = arith.constant 0 : index
    %1 = vector.load %arg1[%c0_1, %c0_2] : memref<256x4xf32, #tpu.memory_space<vmem>>, vector<256x4xf32>
    %cst = arith.constant dense<0.000000e+00> : vector<64x256xf32>
    %2 = tpu.matmul %0, %1, %cst {dimension_numbers = #tpu.dot_dimension_numbers<[1], [1], [0], [0], [0, 0, 1, 0], [], []>} : vector<64x4xf32>, vector<256x4xf32>, vector<64x256xf32> -> vector<64x256xf32>
    %c0_3 = arith.constant 0 : index
    %c0_4 = arith.constant 0 : index
    %3 = vector.load %arg3[%c0_3, %c0_4] : memref<64x1xf32, #tpu.memory_space<vmem>>, vector<64x1xf32>
    %4 = vector.broadcast %3 : vector<64x1xf32> to vector<64x256xf32>
    %5 = arith.addf %2, %4 : vector<64x256xf32>
    %cst_5 = arith.constant 0.000000e+00 : f32
    %6 = vector.broadcast %cst_5 : f32 to vector<64x256xf32>
    %7 = arith.maximumf %5, %6 : vector<64x256xf32>
    %c0_6 = arith.constant 0 : index
    %c0_7 = arith.constant 0 : index
    %8 = vector.load %arg4[%c0_6, %c0_7] : memref<16x64xf32, #tpu.memory_space<vmem>>, vector<16x64xf32>
    %cst_8 = arith.constant dense<0.000000e+00> : vector<16x256xf32>
    %9 = tpu.matmul %8, %7, %cst_8 {dimension_numbers = #tpu.dot_dimension_numbers<[1], [0], [0], [1], [0, 0, 1, 1], [], []>} : vector<16x64xf32>, vector<64x256xf32>, vector<16x256xf32> -> vector<16x256xf32>
    %c0_9 = arith.constant 0 : index
    %c0_10 = arith.constant 0 : index
    %10 = vector.load %arg5[%c0_9, %c0_10] : memref<16x1xf32, #tpu.memory_space<vmem>>, vector<16x1xf32>
    %11 = vector.broadcast %10 : vector<16x1xf32> to vector<16x256xf32>
    %12 = arith.addf %9, %11 : vector<16x256xf32>
    %cst_11 = arith.constant 0.000000e+00 : f32
    %13 = vector.broadcast %cst_11 : f32 to vector<16x256xf32>
    %14 = arith.maximumf %12, %13 : vector<16x256xf32>
    %c0_12 = arith.constant 0 : index
    %c0_13 = arith.constant 0 : index
    %15 = vector.load %arg6[%c0_12, %c0_13] : memref<8x16xf32, #tpu.memory_space<vmem>>, vector<8x16xf32>
    %cst_14 = arith.constant dense<0.000000e+00> : vector<8x256xf32>
    %16 = tpu.matmul %15, %14, %cst_14 {dimension_numbers = #tpu.dot_dimension_numbers<[1], [0], [0], [1], [0, 0, 1, 1], [], []>} : vector<8x16xf32>, vector<16x256xf32>, vector<8x256xf32> -> vector<8x256xf32>
    %c0_15 = arith.constant 0 : index
    %c0_16 = arith.constant 0 : index
    %17 = vector.load %arg7[%c0_15, %c0_16] : memref<8x1xf32, #tpu.memory_space<vmem>>, vector<8x1xf32>
    %18 = vector.broadcast %17 : vector<8x1xf32> to vector<8x256xf32>
    %19 = arith.addf %16, %18 : vector<8x256xf32>
    %cst_17 = arith.constant 0.000000e+00 : f32
    %20 = vector.broadcast %cst_17 : f32 to vector<8x256xf32>
    %21 = arith.maximumf %19, %20 : vector<8x256xf32>
    %c0_18 = arith.constant 0 : index
    %c0_19 = arith.constant 0 : index
    %22 = vector.load %arg8[%c0_18, %c0_19] : memref<1x8xf32, #tpu.memory_space<vmem>>, vector<1x8xf32>
    %cst_20 = arith.constant dense<0.000000e+00> : vector<1x256xf32>
    %23 = tpu.matmul %22, %21, %cst_20 {dimension_numbers = #tpu.dot_dimension_numbers<[1], [0], [0], [1], [0, 0, 1, 1], [], []>} : vector<1x8xf32>, vector<8x256xf32>, vector<1x256xf32> -> vector<1x256xf32>
    %c0_21 = arith.constant 0 : index
    %c0_22 = arith.constant 0 : index
    %24 = vector.load %arg9[%c0_21, %c0_22] : memref<1x1xf32, #tpu.memory_space<vmem>>, vector<1x1xf32>
    %25 = vector.broadcast %24 : vector<1x1xf32> to vector<1x256xf32>
    %26 = arith.addf %23, %25 : vector<1x256xf32>
    %c0_23 = arith.constant 0 : index
    %c0_24 = arith.constant 0 : index
    %27 = vector.load %arg10[%c0_23, %c0_24] : memref<1x256xf32, #tpu.memory_space<vmem>>, vector<1x256xf32>
    tpu.vector_store %arg10[%c0_23, %c0_24], %26 {strides = array<i32>} : memref<1x256xf32, #tpu.memory_space<vmem>>, vector<1x256xf32>,
    return
  }
  func.func @transform_0(%arg0: i32) -> (i32, i32) {
    %c0_i32 = arith.constant 0 : i32
    %c0_i32_0 = arith.constant 0 : i32
    return %arg0, %c0_i32 : i32, i32
  }
  func.func @transform_1(%arg0: i32) -> (i32, i32) {
    %c0_i32 = arith.constant 0 : i32
    %c0_i32_0 = arith.constant 0 : i32
    %c0_i32_1 = arith.constant 0 : i32
    return %c0_i32, %c0_i32_0 : i32, i32
  }
  func.func @transform_2(%arg0: i32) -> (i32, i32) {
    %c0_i32 = arith.constant 0 : i32
    %c0_i32_0 = arith.constant 0 : i32
    %c0_i32_1 = arith.constant 0 : i32
    return %c0_i32, %c0_i32_0 : i32, i32
  }
  func.func @transform_3(%arg0: i32) -> (i32, i32) {
    %c0_i32 = arith.constant 0 : i32
    %c0_i32_0 = arith.constant 0 : i32
    %c0_i32_1 = arith.constant 0 : i32
    return %c0_i32, %c0_i32_0 : i32, i32
  }
  func.func @transform_4(%arg0: i32) -> (i32, i32) {
    %c0_i32 = arith.constant 0 : i32
    %c0_i32_0 = arith.constant 0 : i32
    %c0_i32_1 = arith.constant 0 : i32
    return %c0_i32, %c0_i32_0 : i32, i32
  }
  func.func @transform_5(%arg0: i32) -> (i32, i32) {
    %c0_i32 = arith.constant 0 : i32
    %c0_i32_0 = arith.constant 0 : i32
    %c0_i32_1 = arith.constant 0 : i32
    return %c0_i32, %c0_i32_0 : i32, i32
  }
  func.func @transform_6(%arg0: i32) -> (i32, i32) {
    %c0_i32 = arith.constant 0 : i32
    %c0_i32_0 = arith.constant 0 : i32
    %c0_i32_1 = arith.constant 0 : i32
    return %c0_i32, %c0_i32_0 : i32, i32
  }
  func.func @transform_7(%arg0: i32) -> (i32, i32) {
    %c0_i32 = arith.constant 0 : i32
    %c0_i32_0 = arith.constant 0 : i32
    %c0_i32_1 = arith.constant 0 : i32
    return %c0_i32, %c0_i32_0 : i32, i32
  }
  func.func @transform_8(%arg0: i32) -> (i32, i32) {
    %c0_i32 = arith.constant 0 : i32
    %c0_i32_0 = arith.constant 0 : i32
    %c0_i32_1 = arith.constant 0 : i32
    return %c0_i32, %c0_i32_0 : i32, i32
  }
  func.func @transform_9(%arg0: i32) -> (i32, i32) {
    %c0_i32 = arith.constant 0 : i32
    %c0_i32_0 = arith.constant 0 : i32
    return %c0_i32, %arg0 : i32, i32
  }
}

</mosaic_0001>

<llo_original>
// kernel: tpu_custom_call.1
$region0: #{tpu_custom_call.1}
  #allocation0 [shape = 'u32[]', space=smem, size = 0x4, offset = 0x4, fixed_abs, tag = 'smem constant byte address 0x4 - core index']
  #allocation1 [shape = 'u32[72,128]{1,0:T(1,128)}', space=vmem, size = 0x9000, scoped, tag = 'internal scratch']
  #allocation2 [shape = 'f32[1,1]{1,0:T(1,128)S(1)}', space=vmem, size = 0x200, scoped, tag = 'scoped memory for tpu_custom_call.1']
  %s0 = inlined_call_operand.vmem [shape: f32[256,4], index: 0, kind: input, shape index: {}]
  %s1 = inlined_call_operand.vmem [shape: f32[64,4], index: 1, kind: input, shape index: {}]
  %s2 = inlined_call_operand.vmem [shape: f32[64,1], index: 2, kind: input, shape index: {}]
  %s3 = inlined_call_operand.vmem [shape: f32[16,64], index: 3, kind: input, shape index: {}]
  %s4 = inlined_call_operand.vmem [shape: f32[16,1], index: 4, kind: input, shape index: {}]
  %s5 = inlined_call_operand.vmem [shape: f32[8,16], index: 5, kind: input, shape index: {}]
  %s6 = inlined_call_operand.vmem [shape: f32[8,1], index: 6, kind: input, shape index: {}]
  %s7 = inlined_call_operand.vmem [shape: f32[1,8], index: 7, kind: input, shape index: {}]
  %s8 = inlined_call_operand.<no memory space> [shape: f32[1,1], index: 8, kind: input, shape index: {}]
  %s9 = inlined_call_operand.hbm [shape: f32[1,256], index: 9, kind: output, shape index: {}]
  %s10 = sld [smem:[#allocation0]]
  $region46: #{tpu_custom_call.1} parent=0
    _
  %s12 = ssub.s32 1, %s10
  %s13 = scalar_select 0, %s12, %s10
  %v14 = vstv %s8
  %15 = vst [vmem:[#allocation2] sm:$0x1] %v14
  $region1: #{tpu_custom_call.1} parent=0
    #allocation3 [shape = 'u8[1024]{0}', space=vmem, size = 0x400, scoped, tag = 'output window, operand 0, single buffered']
    #allocation4 [shape = 's32[1]{0}', space=sflag, size = 0x4, scoped, tag = 'scoped memory for tpu_custom_call.1']
    %16 = vsyncpa [#allocation4], 0
    // Predicated region
    $region2: #{tpu_custom_call.1} parent=1 // pred_check
      _
    $region3: #{tpu_custom_call.1} parent=1 // pred_check_branch
      %18 = sbr.rel (0) target = $region5
    $region4: #{tpu_custom_call.1} parent=1 // pred_region
      _
    $region5: #{tpu_custom_call.1} parent=1 // pred_fallthru
      _
    // Predicated region
    $region6: #{tpu_custom_call.1} parent=1 // pred_check
      _
    $region7: #{tpu_custom_call.1} parent=1 // pred_check_branch
      %20 = sbr.rel (0) target = $region9
    $region8: #{tpu_custom_call.1} parent=1 // pred_region
      _
    $region9: #{tpu_custom_call.1} parent=1 // pred_fallthru
      _
    // Predicated region
    $region10: #{tpu_custom_call.1} parent=1 // pred_check
      _
    $region11: #{tpu_custom_call.1} parent=1 // pred_check_branch
      %22 = sbr.rel (0) target = $region13
    $region12: #{tpu_custom_call.1} parent=1 // pred_region
      _
    $region13: #{tpu_custom_call.1} parent=1 // pred_fallthru
      _
    // Predicated region
    $region14: #{tpu_custom_call.1} parent=1 // pred_check
      _
    $region15: #{tpu_custom_call.1} parent=1 // pred_check_branch
      %24 = sbr.rel (0) target = $region17
    $region16: #{tpu_custom_call.1} parent=1 // pred_region
      _
    $region17: #{tpu_custom_call.1} parent=1 // pred_fallthru
      _
    // Predicated region
    $region18: #{tpu_custom_call.1} parent=1 // pred_check
      _
    $region19: #{tpu_custom_call.1} parent=1 // pred_check_branch
      %26 = sbr.rel (0) target = $region21
    $region20: #{tpu_custom_call.1} parent=1 // pred_region
      _
    $region21: #{tpu_custom_call.1} parent=1 // pred_fallthru
      _
    // Predicated region
    $region22: #{tpu_custom_call.1} parent=1 // pred_check
      _
    $region23: #{tpu_custom_call.1} parent=1 // pred_check_branch
      %28 = sbr.rel (0) target = $region25
    $region24: #{tpu_custom_call.1} parent=1 // pred_region
      _
    $region25: #{tpu_custom_call.1} parent=1 // pred_fallthru
      _
    // Predicated region
    $region26: #{tpu_custom_call.1} parent=1 // pred_check
      _
    $region27: #{tpu_custom_call.1} parent=1 // pred_check_branch
      %30 = sbr.rel (0) target = $region29
    $region28: #{tpu_custom_call.1} parent=1 // pred_region
      _
    $region29: #{tpu_custom_call.1} parent=1 // pred_fallthru
      _
    // Predicated region
    $region30: #{tpu_custom_call.1} parent=1 // pred_check
      _
    $region31: #{tpu_custom_call.1} parent=1 // pred_check_branch
      %32 = sbr.rel (0) target = $region33
    $region32: #{tpu_custom_call.1} parent=1 // pred_region
      _
    $region33: #{tpu_custom_call.1} parent=1 // pred_fallthru
      _
    // Predicated region
    $region34: #{tpu_custom_call.1} parent=1 // pred_check
      _
    $region35: #{tpu_custom_call.1} parent=1 // pred_check_branch
      %34 = sbr.rel (0) target = $region37
    $region36: #{tpu_custom_call.1} parent=1 // pred_region
      _
    $region37: #{tpu_custom_call.1} parent=1 // pred_fallthru
      _
    %v35 = vld [vmem:[%s1] sm:$0xff]
    %v36 = vld [vmem:[%s1 + $0x8] sm:$0xff]
    %v37 = vld [vmem:[%s1 + $0x10] sm:$0xff]
    %v38 = vld [vmem:[%s1 + $0x18] sm:$0xff]
    %v39 = vld [vmem:[%s1 + $0x20] sm:$0xff]
    %v40 = vld [vmem:[%s1 + $0x28] sm:$0xff]
    %v41 = vld [vmem:[%s1 + $0x30] sm:$0xff]
    %v42 = vld [vmem:[%s1 + $0x38] sm:$0xff]
    %v43 = vld [vmem:[%s0] sm:$0xff]
    %v44 = vld [vmem:[%s0 + $0x8] sm:$0xff]
    %v45 = vld [vmem:[%s0 + $0x10] sm:$0xff]
    %v46 = vld [vmem:[%s0 + $0x18] sm:$0xff]
    %v47 = vld [vmem:[%s0 + $0x20] sm:$0xff]
    %v48 = vld [vmem:[%s0 + $0x28] sm:$0xff]
    %v49 = vld [vmem:[%s0 + $0x30] sm:$0xff]
    %v50 = vld [vmem:[%s0 + $0x38] sm:$0xff]
    %v51 = vld [vmem:[%s0 + $0x40] sm:$0xff]
    %v52 = vld [vmem:[%s0 + $0x48] sm:$0xff]
    %v53 = vld [vmem:[%s0 + $0x50] sm:$0xff]
    %v54 = vld [vmem:[%s0 + $0x58] sm:$0xff]
    %v55 = vld [vmem:[%s0 + $0x60] sm:$0xff]
    %v56 = vld [vmem:[%s0 + $0x68] sm:$0xff]
    %v57 = vld [vmem:[%s0 + $0x70] sm:$0xff]
    %v58 = vld [vmem:[%s0 + $0x78] sm:$0xff]
    %v59 = vld [vmem:[%s0 + $0x80] sm:$0xff]
    %v60 = vld [vmem:[%s0 + $0x88] sm:$0xff]
    %v61 = vld [vmem:[%s0 + $0x90] sm:$0xff]
    %v62 = vld [vmem:[%s0 + $0x98] sm:$0xff]
    %v63 = vld [vmem:[%s0 + $0xa0] sm:$0xff]
    %v64 = vld [vmem:[%s0 + $0xa8] sm:$0xff]
    %v65 = vld [vmem:[%s0 + $0xb0] sm:$0xff]
    %v66 = vld [vmem:[%s0 + $0xb8] sm:$0xff]
    %v67 = vld [vmem:[%s0 + $0xc0] sm:$0xff]
    %v68 = vld [vmem:[%s0 + $0xc8] sm:$0xff]
    %v69 = vld [vmem:[%s0 + $0xd0] sm:$0xff]
    %v70 = vld [vmem:[%s0 + $0xd8] sm:$0xff]
    %v71 = vld [vmem:[%s0 + $0xe0] sm:$0xff]
    %v72 = vld [vmem:[%s0 + $0xe8] sm:$0xff]
    %v73 = vld [vmem:[%s0 + $0xf0] sm:$0xff]
    %v74 = vld [vmem:[%s0 + $0xf8] sm:$0xff]
    %v75 = vld [vmem:[%s2] sm:$0xff]
    %v76 = vld [vmem:[%s2 + $0x8] sm:$0xff]
    %v77 = vld [vmem:[%s2 + $0x10] sm:$0xff]
    %v78 = vld [vmem:[%s2 + $0x18] sm:$0xff]
    %v79 = vld [vmem:[%s2 + $0x20] sm:$0xff]
    %v80 = vld [vmem:[%s2 + $0x28] sm:$0xff]
    %v81 = vld [vmem:[%s2 + $0x30] sm:$0xff]
    %v82 = vld [vmem:[%s2 + $0x38] sm:$0xff]
    %84 = vset.pattern.permute.xlu0 0
    %85 = vperm.xlu0 %84, %v75
    %v86 = vpop.permute.xlu0 %85
    %89 = vset.pattern.permute.xlu0 0
    %90 = vperm.xlu0 %89, %v76
    %v91 = vpop.permute.xlu0 %90
    %94 = vset.pattern.permute.xlu0 0
    %95 = vperm.xlu0 %94, %v77
    %v96 = vpop.permute.xlu0 %95
    %99 = vset.pattern.permute.xlu0 0
    %100 = vperm.xlu0 %99, %v78
    %v101 = vpop.permute.xlu0 %100
    %104 = vset.pattern.permute.xlu0 0
    %105 = vperm.xlu0 %104, %v79
    %v106 = vpop.permute.xlu0 %105
    %109 = vset.pattern.permute.xlu0 0
    %110 = vperm.xlu0 %109, %v80
    %v111 = vpop.permute.xlu0 %110
    %114 = vset.pattern.permute.xlu0 0
    %115 = vperm.xlu0 %114, %v81
    %v116 = vpop.permute.xlu0 %115
    %119 = vset.pattern.permute.xlu0 0
    %120 = vperm.xlu0 %119, %v82
    %v121 = vpop.permute.xlu0 %120
    %vm123 = vcmask 31744
    %v125 = vsel %vm123, %v35, 0
    %v128 = vsel %vm123, %v36, 0
    %v131 = vsel %vm123, %v37, 0
    %v134 = vsel %vm123, %v38, 0
    %v137 = vsel %vm123, %v39, 0
    %v140 = vsel %vm123, %v40, 0
    %v143 = vsel %vm123, %v41, 0
    %v146 = vsel %vm123, %v42, 0
    %v149 = vsel %vm123, %v43, 0
    %v152 = vsel %vm123, %v44, 0
    %v155 = vsel %vm123, %v45, 0
    %v158 = vsel %vm123, %v46, 0
    %v161 = vsel %vm123, %v47, 0
    %v164 = vsel %vm123, %v48, 0
    %v167 = vsel %vm123, %v49, 0
    %v170 = vsel %vm123, %v50, 0
    %v173 = vsel %vm123, %v51, 0
    %v176 = vsel %vm123, %v52, 0
    %v179 = vsel %vm123, %v53, 0
    %v182 = vsel %vm123, %v54, 0
    %v185 = vsel %vm123, %v55, 0
    %v188 = vsel %vm123, %v56, 0
    %v191 = vsel %vm123, %v57, 0
    %v194 = vsel %vm123, %v58, 0
    %v197 = vsel %vm123, %v59, 0
    %v200 = vsel %vm123, %v60, 0
    %v203 = vsel %vm123, %v61, 0
    %v206 = vsel %vm123, %v62, 0
    %v209 = vsel %vm123, %v63, 0
    %v212 = vsel %vm123, %v64, 0
    %v215 = vsel %vm123, %v65, 0
    %v218 = vsel %vm123, %v66, 0
    %v221 = vsel %vm123, %v67, 0
    %v224 = vsel %vm123, %v68, 0
    %v227 = vsel %vm123, %v69, 0
    %v230 = vsel %vm123, %v70, 0
    %v233 = vsel %vm123, %v71, 0
    %v236 = vsel %vm123, %v72, 0
    %v239 = vsel %vm123, %v73, 0
    %v242 = vsel %vm123, %v74, 0
    %244 = vmatpush.xpose.msra.mxu0 %v194
    %245 = vmatpush.xpose.msra.mxu0 %v191
    %246 = vmatpush.xpose.msra.mxu0 %v188
    %247 = vmatpush.xpose.msra.mxu0 %v185
    %248 = vmatpush.xpose.msra.mxu0 %v182
    %249 = vmatpush.xpose.msra.mxu0 %v179
    %250 = vmatpush.xpose.msra.mxu0 %v176
    %251 = vmatpush.xpose.msra.mxu0 %v173
    %252 = vmatpush.xpose.msra.mxu0 %v170
    %253 = vmatpush.xpose.msra.mxu0 %v167
    %254 = vmatpush.xpose.msra.mxu0 %v164
    %255 = vmatpush.xpose.msra.mxu0 %v161
    %256 = vmatpush.xpose.msra.mxu0 %v158
    %257 = vmatpush.xpose.msra.mxu0 %v155
    %258 = vmatpush.xpose.msra.mxu0 %v152
    %259 = vmatpush.xpose.msra.mxu0 %v149
    %260 = vmatmul.f32.gmra.mxu0 %v125
    %v261 = vpop.f32.mrf.mxu0
    %v262 = vadd.f32 %v86, %v261
    %263 = vmatmul.f32.gmra.mxu0 %v128
    %v264 = vpop.f32.mrf.mxu0
    %v265 = vadd.f32 %v91, %v264
    %266 = vmatmul.f32.gmra.mxu0 %v131
    %v267 = vpop.f32.mrf.mxu0
    %v268 = vadd.f32 %v96, %v267
    %269 = vmatmul.f32.gmra.mxu0 %v134
    %v270 = vpop.f32.mrf.mxu0
    %v271 = vadd.f32 %v101, %v270
    %272 = vmatmul.f32.gmra.mxu0 %v137
    %v273 = vpop.f32.mrf.mxu0
    %v274 = vadd.f32 %v106, %v273
    %275 = vmatmul.f32.gmra.mxu0 %v140
    %v276 = vpop.f32.mrf.mxu0
    %v277 = vadd.f32 %v111, %v276
    %278 = vmatmul.f32.gmra.mxu0 %v143
    %v279 = vpop.f32.mrf.mxu0
    %v280 = vadd.f32 %v116, %v279
    %281 = vmatmul.f32.gmra.mxu0 %v146
    %v282 = vpop.f32.mrf.mxu0
    %v283 = vadd.f32 %v121, %v282
    %284 = vdwg.mxu0
    %285 = vmatpush.xpose.msra.mxu0 %v242
    %286 = vmatpush.xpose.msra.mxu0 %v239
    %287 = vmatpush.xpose.msra.mxu0 %v236
    %288 = vmatpush.xpose.msra.mxu0 %v233
    %289 = vmatpush.xpose.msra.mxu0 %v230
    %290 = vmatpush.xpose.msra.mxu0 %v227
    %291 = vmatpush.xpose.msra.mxu0 %v224
    %292 = vmatpush.xpose.msra.mxu0 %v221
    %293 = vmatpush.xpose.msra.mxu0 %v218
    %294 = vmatpush.xpose.msra.mxu0 %v215
    %295 = vmatpush.xpose.msra.mxu0 %v212
    %296 = vmatpush.xpose.msra.mxu0 %v209
    %297 = vmatpush.xpose.msra.mxu0 %v206
    %298 = vmatpush.xpose.msra.mxu0 %v203
    %299 = vmatpush.xpose.msra.mxu0 %v200
    %300 = vmatpush.xpose.msra.mxu0 %v197
    %301 = vmatmul.f32.gmra.mxu0 %v125
    %v302 = vpop.f32.mrf.mxu0
    %v303 = vadd.f32 %v86, %v302
    %304 = vmatmul.f32.gmra.mxu0 %v128
    %v305 = vpop.f32.mrf.mxu0
    %v306 = vadd.f32 %v91, %v305
    %307 = vmatmul.f32.gmra.mxu0 %v131
    %v308 = vpop.f32.mrf.mxu0
    %v309 = vadd.f32 %v96, %v308
    %310 = vmatmul.f32.gmra.mxu0 %v134
    %v311 = vpop.f32.mrf.mxu0
    %v312 = vadd.f32 %v101, %v311
    %313 = vmatmul.f32.gmra.mxu0 %v137
    %v314 = vpop.f32.mrf.mxu0
    %v315 = vadd.f32 %v106, %v314
    %316 = vmatmul.f32.gmra.mxu0 %v140
    %v317 = vpop.f32.mrf.mxu0
    %v318 = vadd.f32 %v111, %v317
    %319 = vmatmul.f32.gmra.mxu0 %v143
    %v320 = vpop.f32.mrf.mxu0
    %v321 = vadd.f32 %v116, %v320
    %322 = vmatmul.f32.gmra.mxu0 %v146
    %v323 = vpop.f32.mrf.mxu0
    %v324 = vadd.f32 %v121, %v323
    %325 = vdwg.mxu0
    %v326 = vmax.f32 %v262, 0.0
    %v327 = vmax.f32 %v303, 0.0
    %v328 = vmax.f32 %v265, 0.0
    %v329 = vmax.f32 %v306, 0.0
    %v330 = vmax.f32 %v268, 0.0
    %v331 = vmax.f32 %v309, 0.0
    %v332 = vmax.f32 %v271, 0.0
    %v333 = vmax.f32 %v312, 0.0
    %v334 = vmax.f32 %v274, 0.0
    %v335 = vmax.f32 %v315, 0.0
    %v336 = vmax.f32 %v277, 0.0
    %v337 = vmax.f32 %v318, 0.0
    %v338 = vmax.f32 %v280, 0.0
    %v339 = vmax.f32 %v321, 0.0
    %v340 = vmax.f32 %v283, 0.0
    %v341 = vmax.f32 %v324, 0.0
    %v342 = vld [vmem:[%s3] sm:$0xff]
    %v343 = vld [vmem:[%s3 + $0x8] sm:$0xff]
    %v344 = vld [vmem:[%s4] sm:$0xff]
    %v345 = vld [vmem:[%s4 + $0x8] sm:$0xff]
    %347 = vset.pattern.permute.xlu0 0
    %348 = vperm.xlu0 %347, %v344
    %v349 = vpop.permute.xlu0 %348
    %352 = vset.pattern.permute.xlu0 0
    %353 = vperm.xlu0 %352, %v345
    %v354 = vpop.permute.xlu0 %353
    %vm356 = vcmask 523264
    %v358 = vsel %vm356, %v342, 0
    %v361 = vsel %vm356, %v343, 0
    %363 = vmatpush.msra.mxu0 0.0
    %364 = vmatpush.msra.mxu0 0.0
    %365 = vmatpush.msra.mxu0 0.0
    %366 = vmatpush.msra.mxu0 0.0
    %367 = vmatpush.msra.mxu0 0.0
    %368 = vmatpush.msra.mxu0 0.0
    %369 = vmatpush.msra.mxu0 0.0
    %370 = vmatpush.msra.mxu0 0.0
    %371 = vmatpush.msra.mxu0 %v340
    %372 = vmatpush.msra.mxu0 %v338
    %373 = vmatpush.msra.mxu0 %v336
    %374 = vmatpush.msra.mxu0 %v334
    %375 = vmatpush.msra.mxu0 %v332
    %376 = vmatpush.msra.mxu0 %v330
    %377 = vmatpush.msra.mxu0 %v328
    %378 = vmatpush.msra.mxu0 %v326
    %379 = vmatmul.f32.gmra.mxu0 %v358
    %v380 = vpop.f32.mrf.mxu0
    %v381 = vadd.f32 %v349, %v380
    %382 = vmatmul.f32.gmra.mxu0 %v361
    %v383 = vpop.f32.mrf.mxu0
    %v384 = vadd.f32 %v354, %v383
    %385 = vdwg.mxu0
    %386 = vmatpush.msra.mxu0 0.0
    %387 = vmatpush.msra.mxu0 0.0
    %388 = vmatpush.msra.mxu0 0.0
    %389 = vmatpush.msra.mxu0 0.0
    %390 = vmatpush.msra.mxu0 0.0
    %391 = vmatpush.msra.mxu0 0.0
    %392 = vmatpush.msra.mxu0 0.0
    %393 = vmatpush.msra.mxu0 0.0
    %394 = vmatpush.msra.mxu0 %v341
    %395 = vmatpush.msra.mxu0 %v339
    %396 = vmatpush.msra.mxu0 %v337
    %397 = vmatpush.msra.mxu0 %v335
    %398 = vmatpush.msra.mxu0 %v333
    %399 = vmatpush.msra.mxu0 %v331
    %400 = vmatpush.msra.mxu0 %v329
    %401 = vmatpush.msra.mxu0 %v327
    %402 = vmatmul.f32.gmra.mxu0 %v358
    %v403 = vpop.f32.mrf.mxu0
    %v404 = vadd.f32 %v349, %v403
    %405 = vmatmul.f32.gmra.mxu0 %v361
    %v406 = vpop.f32.mrf.mxu0
    %v407 = vadd.f32 %v354, %v406
    %408 = vdwg.mxu0
    %v409 = vmax.f32 %v381, 0.0
    %v410 = vmax.f32 %v404, 0.0
    %v411 = vmax.f32 %v384, 0.0
    %v412 = vmax.f32 %v407, 0.0
    %v413 = vld [vmem:[%s5] sm:$0xff]
    %v414 = vld [vmem:[%s6] sm:$0xff]
    %416 = vset.pattern.permute.xlu0 0
    %417 = vperm.xlu0 %416, %v414
    %v418 = vpop.permute.xlu0 %417
    %vm420 = vcmask 130048
    %v422 = vsel %vm420, %v413, 0
    %424 = vmatpush.msra.mxu0 0.0
    %425 = vmatpush.msra.mxu0 0.0
    %426 = vmatpush.msra.mxu0 0.0
    %427 = vmatpush.msra.mxu0 0.0
    %428 = vmatpush.msra.mxu0 0.0
    %429 = vmatpush.msra.mxu0 0.0
    %430 = vmatpush.msra.mxu0 0.0
    %431 = vmatpush.msra.mxu0 0.0
    %432 = vmatpush.msra.mxu0 0.0
    %433 = vmatpush.msra.mxu0 0.0
    %434 = vmatpush.msra.mxu0 0.0
    %435 = vmatpush.msra.mxu0 0.0
    %436 = vmatpush.msra.mxu0 0.0
    %437 = vmatpush.msra.mxu0 0.0
    %438 = vmatpush.msra.mxu0 %v411
    %439 = vmatpush.msra.mxu0 %v409
    %440 = vmatmul.f32.gmra.mxu0 %v422
    %v441 = vpop.f32.mrf.mxu0
    %v442 = vadd.f32 %v418, %v441
    %443 = vdwg.mxu0
    %444 = vmatpush.msra.mxu0 0.0
    %445 = vmatpush.msra.mxu0 0.0
    %446 = vmatpush.msra.mxu0 0.0
    %447 = vmatpush.msra.mxu0 0.0
    %448 = vmatpush.msra.mxu0 0.0
    %449 = vmatpush.msra.mxu0 0.0
    %450 = vmatpush.msra.mxu0 0.0
    %451 = vmatpush.msra.mxu0 0.0
    %452 = vmatpush.msra.mxu0 0.0
    %453 = vmatpush.msra.mxu0 0.0
    %454 = vmatpush.msra.mxu0 0.0
    %455 = vmatpush.msra.mxu0 0.0
    %456 = vmatpush.msra.mxu0 0.0
    %457 = vmatpush.msra.mxu0 0.0
    %458 = vmatpush.msra.mxu0 %v412
    %459 = vmatpush.msra.mxu0 %v410
    %460 = vmatmul.f32.gmra.mxu0 %v422
    %v461 = vpop.f32.mrf.mxu0
    %v462 = vadd.f32 %v418, %v461
    %463 = vdwg.mxu0
    %v464 = vmax.f32 %v442, 0.0
    %v465 = vmax.f32 %v462, 0.0
    %v466 = vld [vmem:[%s7] sm:$0x1]
    %v467 = vld [vmem:[#allocation2] sm:$0x1]
    %469 = vset.pattern.permute.xlu0 0
    %470 = vperm.xlu0 %469, %v467
    %v471 = vpop.permute.xlu0 %470
    %v473 = vperm.slane %v471, 0
    %vm474 = vcmask 64512
    %v476 = vsel %vm474, %v466, 0
    %478 = vmatpush.msra.mxu0 0.0
    %479 = vmatpush.msra.mxu0 0.0
    %480 = vmatpush.msra.mxu0 0.0
    %481 = vmatpush.msra.mxu0 0.0
    %482 = vmatpush.msra.mxu0 0.0
    %483 = vmatpush.msra.mxu0 0.0
    %484 = vmatpush.msra.mxu0 0.0
    %485 = vmatpush.msra.mxu0 0.0
    %486 = vmatpush.msra.mxu0 0.0
    %487 = vmatpush.msra.mxu0 0.0
    %488 = vmatpush.msra.mxu0 0.0
    %489 = vmatpush.msra.mxu0 0.0
    %490 = vmatpush.msra.mxu0 0.0
    %491 = vmatpush.msra.mxu0 0.0
    %492 = vmatpush.msra.mxu0 0.0
    %493 = vmatpush.msra.mxu0 %v464
    %494 = vmatmul.f32.gmra.mxu0 %v476
    %v495 = vpop.f32.mrf.mxu0
    %v496 = vadd.f32 %v473, %v495
    %497 = vdwg.mxu0
    %498 = vmatpush.msra.mxu0 0.0
    %499 = vmatpush.msra.mxu0 0.0
    %500 = vmatpush.msra.mxu0 0.0
    %501 = vmatpush.msra.mxu0 0.0
    %502 = vmatpush.msra.mxu0 0.0
    %503 = vmatpush.msra.mxu0 0.0
    %504 = vmatpush.msra.mxu0 0.0
    %505 = vmatpush.msra.mxu0 0.0
    %506 = vmatpush.msra.mxu0 0.0
    %507 = vmatpush.msra.mxu0 0.0
    %508 = vmatpush.msra.mxu0 0.0
    %509 = vmatpush.msra.mxu0 0.0
    %510 = vmatpush.msra.mxu0 0.0
    %511 = vmatpush.msra.mxu0 0.0
    %512 = vmatpush.msra.mxu0 0.0
    %513 = vmatpush.msra.mxu0 %v465
    %514 = vmatmul.f32.gmra.mxu0 %v476
    %v515 = vpop.f32.mrf.mxu0
    %v516 = vadd.f32 %v473, %v515
    %517 = vdwg.mxu0
    %v520 = vrot.slane %v516, 7
    %vm521 = vcmask 1040384
    %v522 = vsel %vm521, %v496, %v520
    %v524 = vlaneseq
    %vm525 = vcmp.ge.s32.totalorder %v524, 0
    %vm526 = vcmp.lt.s32.totalorder %v524, 256
    %vm527 = vmand %vm525, %vm526
    %528 = vst.msk [vmem:[#allocation3] sm:$0x3] %vm527, %v522
    // Predicated region
    $region38: #{tpu_custom_call.1} parent=1 // pred_check
      _
    $region39: #{tpu_custom_call.1} parent=1 // pred_check_branch
      %530 = sbr.rel (0) target = $region41
    $region40: #{tpu_custom_call.1} parent=1 // pred_region
      %532 = vsyncadd [#allocation4], 0
      %s534 = sshll.u32 [#allocation3], 4
      %s535 = int_to_ptr.vmem [resolvable:$true] %s534
      %s536 = sshll.u32 %s9, 4
      %s537 = int_to_ptr.hbm [resolvable:$true] %s536
      %539 = dma.vmem_to_hbm [thread:$0]  %s535, 32, %s537, [#allocation4]
    $region41: #{tpu_custom_call.1} parent=1 // pred_fallthru
      _
    // Predicated region
    $region42: #{tpu_custom_call.1} parent=1 // pred_check
      _
    $region43: #{tpu_custom_call.1} parent=1 // pred_check_branch
      %541 = sbr.rel (0) target = $region45
    $region44: #{tpu_custom_call.1} parent=1 // pred_region
      %543 = dma.done [#allocation4], 32
    $region45: #{tpu_custom_call.1} parent=1 // pred_fallthru
      _
    %544 = vsyncpa [#allocation4], 1

</llo_original>
